<compile_context>
chip_gen: v6e
topology: v6e:2x2x1
jax: 0.10.0
libtpu: 0.0.40
codegen_flags: <defaults>
</compile_context>

<pallas_src>
import math

import jax
import jax.numpy as jnp
from jax.experimental import pallas as pl
from jax.experimental.pallas import tpu as pltpu


def safe_action_kernel(s_ref, a_ref, ws_ref, bs_ref, wa_ref, ba_ref,
                       wc1s_ref, wc1a_ref, bc1_ref, wc2_ref, bc2_ref, o_ref):
    # Batch on the 128-lane axis everywhere: inputs (dim, bt), hidden (H, bt).
    hs = jnp.dot(ws_ref[...], s_ref[...],
                 preferred_element_type=jnp.float32) + bs_ref[...]
    hs = jnp.maximum(hs, 0.0)                                   # (H, bt)

    ha = jnp.dot(wa_ref[...], a_ref[...],
                 preferred_element_type=jnp.float32) + ba_ref[...]
    ha = jnp.maximum(ha, 0.0)                                   # (H, bt)

    # Combined layer 1 without any concat: split Wc1 into its two H-col halves.
    h2 = (jnp.dot(wc1s_ref[...], hs, preferred_element_type=jnp.float32)
          + jnp.dot(wc1a_ref[...], ha, preferred_element_type=jnp.float32)
          + bc1_ref[...])
    h2 = jnp.maximum(h2, 0.0)                                   # (H, bt)

    # Combined layer 2 + sigmoid: (1, H) @ (H, bt) -> lane-dense (1, bt) row.
    z = jnp.dot(wc2_ref[...], h2,
                preferred_element_type=jnp.float32) + bc2_ref[...]
    o_ref[...] = jax.nn.sigmoid(z)


def _round_up(v, m):
    return ((v + m - 1) // m) * m


def safe_action_forward(state, action, packed, *,
                        max_batch_tile=32768, target_tiles=8):
    """state: (B, state_dim), action: (B, action_dim) -> (B, 1) float32."""
    ws, bs, wa, ba, wc1s, wc1a, bc1, wc2, bc2 = packed
    B, state_dim = state.shape
    action_dim = action.shape[1]

    # Adaptive, lane-aligned batch tile: aim for ~target_tiles grid steps
    # (keeps v7x's 2 TCs busy), bounded by a VMEM-safe cap (~0.5 KB/element).
    b128 = _round_up(B, 128)
    bt = _round_up(pl.cdiv(b128, target_tiles), 128)
    bt = max(128, min(bt, _round_up(max_batch_tile, 128)))
    b_pad = _round_up(B, bt)
    num_tiles = b_pad // bt

    # Pad batch then put it on the lane axis (pad + transpose fuse under jit;
    # no concatenate pass over the batch).
    s_t = jnp.pad(state, ((0, b_pad - B), (0, 0))).T      # (state_dim, b_pad)
    a_t = jnp.pad(action, ((0, b_pad - B), (0, 0))).T     # (action_dim, b_pad)

    def const_spec(arr):
        nd = arr.ndim
        return pl.BlockSpec(arr.shape, lambda i, _nd=nd: (0,) * _nd)

    out = pl.pallas_call(
        safe_action_kernel,
        out_shape=jax.ShapeDtypeStruct((1, b_pad), jnp.float32),
        grid_spec=pltpu.PrefetchScalarGridSpec(
            num_scalar_prefetch=0,
            grid=(num_tiles,),
            in_specs=[
                pl.BlockSpec((state_dim, bt), lambda i: (0, i)),
                pl.BlockSpec((action_dim, bt), lambda i: (0, i)),
                const_spec(ws), const_spec(bs),
                const_spec(wa), const_spec(ba),
                const_spec(wc1s), const_spec(wc1a), const_spec(bc1),
                const_spec(wc2), const_spec(bc2),
            ],
            out_specs=pl.BlockSpec((1, bt), lambda i: (0, i)),
        ),
        compiler_params=pltpu.CompilerParams(
            dimension_semantics=("parallel",),
            vmem_limit_bytes=64 << 20),
    )(s_t, a_t, ws, bs, wa, ba, wc1s, wc1a, bc1, wc2, bc2)

    # (1, b_pad) row -> (B, 1) column, trimming the lane padding.
    return out[0, :B, None]


def init_params(key, state_dim, action_dim, hidden_dim):
    """PyTorch nn.Linear-style init; weights stored (out_features, in_features)."""
    def linear(key, fan_in, fan_out):
        k1, k2 = jax.random.split(key)
        bound = 1.0 / math.sqrt(fan_in)
        w = jax.random.uniform(k1, (fan_out, fan_in), jnp.float32, -bound, bound)
        b = jax.random.uniform(k2, (fan_out,), jnp.float32, -bound, bound)
        return w, b

    k1, k2, k3, k4 = jax.random.split(key, 4)
    ws, bs = linear(k1, state_dim, hidden_dim)
    wa, ba = linear(k2, action_dim, hidden_dim)
    wc1, bc1 = linear(k3, 2 * hidden_dim, hidden_dim)
    wc2, bc2 = linear(k4, hidden_dim, 1)
    return dict(ws=ws, bs=bs, wa=wa, ba=ba, wc1=wc1, bc1=bc1, wc2=wc2, bc2=bc2)


def pack_params(p, hidden_dim):
    """Kernel-layout params (done once, outside the kernel)."""
    H = hidden_dim
    ws = p["ws"]                              # (H, state_dim)
    wa = p["wa"]                              # (H, action_dim)
    bs = p["bs"].reshape(H, 1)
    ba = p["ba"].reshape(H, 1)
    wc1s = p["wc1"][:, :H]                    # (H, H) acting on hs
    wc1a = p["wc1"][:, H:]                    # (H, H) acting on ha
    bc1 = p["bc1"].reshape(H, 1)
    wc2 = p["wc2"]                            # (1, H)
    bc2 = p["bc2"].reshape(1, 1)
    return (ws, bs, wa, ba, wc1s, wc1a, bc1, wc2, bc2)


def safe_action_reference(state, action, p):
    hs = jnp.maximum(state @ p["ws"].T + p["bs"], 0.0)
    ha = jnp.maximum(action @ p["wa"].T + p["ba"], 0.0)
    h = jnp.concatenate([hs, ha], axis=-1)
    h2 = jnp.maximum(h @ p["wc1"].T + p["bc1"], 0.0)
    return jax.nn.sigmoid(h2 @ p["wc2"].T + p["bc2"])


if __name__ == "__main__":
    state_dim, action_dim, hidden_dim = 12, 4, 32

    key = jax.random.PRNGKey(0)
    kp, ks, ka = jax.random.split(key, 3)

    params = init_params(kp, state_dim, action_dim, hidden_dim)
    packed = pack_params(params, hidden_dim)

    fwd = jax.jit(lambda s, a: safe_action_forward(s, a, packed))

    # Small single-tile case (num_tiles == 1).
    batch = 16
    state = jax.random.normal(ks, (batch, state_dim), jnp.float32)
    action = jax.random.normal(ka, (batch, action_dim), jnp.float32)
    out = jax.block_until_ready(fwd(state, action))
    ref = safe_action_reference(state, action, params)
    assert out.shape == (batch, 1)
    assert jnp.allclose(out, ref, atol=1e-5, rtol=1e-5), "mismatch (B=16)"

    # Multi-tile case (exercises num_tiles > 1 with the (1, b_pad) output).
    batch2 = 300
    ks2, ka2 = jax.random.split(jax.random.PRNGKey(1))
    state2 = jax.random.normal(ks2, (batch2, state_dim), jnp.float32)
    action2 = jax.random.normal(ka2, (batch2, action_dim), jnp.float32)
    out2 = jax.block_until_ready(fwd(state2, action2))
    ref2 = safe_action_reference(state2, action2, params)
    assert out2.shape == (batch2, 1)
    assert jnp.allclose(out2, ref2, atol=1e-5, rtol=1e-5), "mismatch (B=300)"

    print("KERNEL_OK")
</pallas_src>

<mosaic_0001>
module attributes {stable_mosaic.version = 11 : i64} {
  func.func @safe_action_kernel(%arg0: i32, %arg1: memref<12x128xf32, #tpu.memory_space<vmem>>, %arg2: memref<4x128xf32, #tpu.memory_space<vmem>>, %arg3: memref<32x12xf32, #tpu.memory_space<vmem>>, %arg4: memref<32x1xf32, #tpu.memory_space<vmem>>, %arg5: memref<32x4xf32, #tpu.memory_space<vmem>>, %arg6: memref<32x1xf32, #tpu.memory_space<vmem>>, %arg7: memref<32x32xf32, #tpu.memory_space<vmem>>, %arg8: memref<32x32xf32, #tpu.memory_space<vmem>>, %arg9: memref<32x1xf32, #tpu.memory_space<vmem>>, %arg10: memref<1x32xf32, #tpu.memory_space<vmem>>, %arg11: memref<1x1xf32, #tpu.memory_space<vmem>>, %arg12: memref<1x128xf32, #tpu.memory_space<vmem>>) attributes {dimension_semantics = [#tpu.dimension_semantics<parallel>], iteration_bounds = array<i64: 1>, scalar_prefetch = 0 : i64, scratch_operands = 0 : i64, tpu.core_type = #tpu.core_type<tc>, window_params = [{transform_indices = @transform_0, window_bounds = array<i64: 12, 128>}, {transform_indices = @transform_1, window_bounds = array<i64: 4, 128>}, {pipeline_mode = #tpu.pipeline_mode<synchronous>, transform_indices = @transform_2, window_bounds = array<i64: 32, 12>}, {pipeline_mode = #tpu.pipeline_mode<synchronous>, transform_indices = @transform_3, window_bounds = array<i64: 32, 1>}, {pipeline_mode = #tpu.pipeline_mode<synchronous>, transform_indices = @transform_4, window_bounds = array<i64: 32, 4>}, {pipeline_mode = #tpu.pipeline_mode<synchronous>, transform_indices = @transform_5, window_bounds = array<i64: 32, 1>}, {pipeline_mode = #tpu.pipeline_mode<synchronous>, transform_indices = @transform_6, window_bounds = array<i64: 32, 32>}, {pipeline_mode = #tpu.pipeline_mode<synchronous>, transform_indices = @transform_7, window_bounds = array<i64: 32, 32>}, {pipeline_mode = #tpu.pipeline_mode<synchronous>, transform_indices = @transform_8, window_bounds = array<i64: 32, 1>}, {pipeline_mode = #tpu.pipeline_mode<synchronous>, transform_indices = @transform_9, window_bounds = array<i64: 1, 32>}, {pipeline_mode = #tpu.pipeline_mode<synchronous>, transform_indices = @transform_10, window_bounds = array<i64: 1, 1>}, {transform_indices = @transform_11, window_bounds = array<i64: 1, 128>}]} {
    %c0 = arith.constant 0 : index
    %c0_0 = arith.constant 0 : index
    %0 = vector.load %arg3[%c0, %c0_0] : memref<32x12xf32, #tpu.memory_space<vmem>>, vector<32x12xf32>
    %c0_1 = arith.constant 0 : index
    %c0_2 = arith.constant 0 : index
    %1 = vector.load %arg1[%c0_1, %c0_2] : memref<12x128xf32, #tpu.memory_space<vmem>>, vector<12x128xf32>
    %cst = arith.constant dense<0.000000e+00> : vector<32x128xf32>
    %2 = tpu.matmul %0, %1, %cst {dimension_numbers = #tpu.dot_dimension_numbers<[1], [0], [0], [1], [0, 0, 1, 1], [], []>} : vector<32x12xf32>, vector<12x128xf32>, vector<32x128xf32> -> vector<32x128xf32>
    %c0_3 = arith.constant 0 : index
    %c0_4 = arith.constant 0 : index
    %3 = vector.load %arg4[%c0_3, %c0_4] : memref<32x1xf32, #tpu.memory_space<vmem>>, vector<32x1xf32>
    %4 = vector.broadcast %3 : vector<32x1xf32> to vector<32x128xf32>
    %5 = arith.addf %2, %4 : vector<32x128xf32>
    %cst_5 = arith.constant 0.000000e+00 : f32
    %6 = vector.broadcast %cst_5 : f32 to vector<32x128xf32>
    %7 = arith.maximumf %5, %6 : vector<32x128xf32>
    %c0_6 = arith.constant 0 : index
    %c0_7 = arith.constant 0 : index
    %8 = vector.load %arg5[%c0_6, %c0_7] : memref<32x4xf32, #tpu.memory_space<vmem>>, vector<32x4xf32>
    %c0_8 = arith.constant 0 : index
    %c0_9 = arith.constant 0 : index
    %9 = vector.load %arg2[%c0_8, %c0_9] : memref<4x128xf32, #tpu.memory_space<vmem>>, vector<4x128xf32>
    %cst_10 = arith.constant dense<0.000000e+00> : vector<32x128xf32>
    %10 = tpu.matmul %8, %9, %cst_10 {dimension_numbers = #tpu.dot_dimension_numbers<[1], [0], [0], [1], [0, 0, 1, 1], [], []>} : vector<32x4xf32>, vector<4x128xf32>, vector<32x128xf32> -> vector<32x128xf32>
    %c0_11 = arith.constant 0 : index
    %c0_12 = arith.constant 0 : index
    %11 = vector.load %arg6[%c0_11, %c0_12] : memref<32x1xf32, #tpu.memory_space<vmem>>, vector<32x1xf32>
    %12 = vector.broadcast %11 : vector<32x1xf32> to vector<32x128xf32>
    %13 = arith.addf %10, %12 : vector<32x128xf32>
    %cst_13 = arith.constant 0.000000e+00 : f32
    %14 = vector.broadcast %cst_13 : f32 to vector<32x128xf32>
    %15 = arith.maximumf %13, %14 : vector<32x128xf32>
    %c0_14 = arith.constant 0 : index
    %c0_15 = arith.constant 0 : index
    %16 = vector.load %arg7[%c0_14, %c0_15] : memref<32x32xf32, #tpu.memory_space<vmem>>, vector<32x32xf32>
    %cst_16 = arith.constant dense<0.000000e+00> : vector<32x128xf32>
    %17 = tpu.matmul %16, %7, %cst_16 {dimension_numbers = #tpu.dot_dimension_numbers<[1], [0], [0], [1], [0, 0, 1, 1], [], []>} : vector<32x32xf32>, vector<32x128xf32>, vector<32x128xf32> -> vector<32x128xf32>
    %c0_17 = arith.constant 0 : index
    %c0_18 = arith.constant 0 : index
    %18 = vector.load %arg8[%c0_17, %c0_18] : memref<32x32xf32, #tpu.memory_space<vmem>>, vector<32x32xf32>
    %cst_19 = arith.constant dense<0.000000e+00> : vector<32x128xf32>
    %19 = tpu.matmul %18, %15, %cst_19 {dimension_numbers = #tpu.dot_dimension_numbers<[1], [0], [0], [1], [0, 0, 1, 1], [], []>} : vector<32x32xf32>, vector<32x128xf32>, vector<32x128xf32> -> vector<32x128xf32>
    %20 = arith.addf %17, %19 : vector<32x128xf32>
    %c0_20 = arith.constant 0 : index
    %c0_21 = arith.constant 0 : index
    %21 = vector.load %arg9[%c0_20, %c0_21] : memref<32x1xf32, #tpu.memory_space<vmem>>, vector<32x1xf32>
    %22 = vector.broadcast %21 : vector<32x1xf32> to vector<32x128xf32>
    %23 = arith.addf %20, %22 : vector<32x128xf32>
    %cst_22 = arith.constant 0.000000e+00 : f32
    %24 = vector.broadcast %cst_22 : f32 to vector<32x128xf32>
    %25 = arith.maximumf %23, %24 : vector<32x128xf32>
    %c0_23 = arith.constant 0 : index
    %c0_24 = arith.constant 0 : index
    %26 = vector.load %arg10[%c0_23, %c0_24] : memref<1x32xf32, #tpu.memory_space<vmem>>, vector<1x32xf32>
    %cst_25 = arith.constant dense<0.000000e+00> : vector<1x128xf32>
    %27 = tpu.matmul %26, %25, %cst_25 {dimension_numbers = #tpu.dot_dimension_numbers<[1], [0], [0], [1], [0, 0, 1, 1], [], []>} : vector<1x32xf32>, vector<32x128xf32>, vector<1x128xf32> -> vector<1x128xf32>
    %c0_26 = arith.constant 0 : index
    %c0_27 = arith.constant 0 : index
    %28 = vector.load %arg11[%c0_26, %c0_27] : memref<1x1xf32, #tpu.memory_space<vmem>>, vector<1x1xf32>
    %29 = vector.broadcast %28 : vector<1x1xf32> to vector<1x128xf32>
    %30 = arith.addf %27, %29 : vector<1x128xf32>
    %31 = arith.negf %30 : vector<1x128xf32>
    %32 = math.exp %31 : vector<1x128xf32>
    %cst_28 = arith.constant 1.000000e+00 : f32
    %33 = vector.broadcast %cst_28 : f32 to vector<1x128xf32>
    %34 = arith.addf %33, %32 : vector<1x128xf32>
    %35 = arith.divf %33, %34 : vector<1x128xf32>
    %c0_29 = arith.constant 0 : index
    %c0_30 = arith.constant 0 : index
    %36 = vector.load %arg12[%c0_29, %c0_30] : memref<1x128xf32, #tpu.memory_space<vmem>>, vector<1x128xf32>
    tpu.vector_store %arg12[%c0_29, %c0_30], %35 {strides = array<i32>} : memref<1x128xf32, #tpu.memory_space<vmem>>, vector<1x128xf32>,
    return
  }
  func.func @transform_0(%arg0: i32) -> (i32, i32) {
    %c0_i32 = arith.constant 0 : i32
    %c0_i32_0 = arith.constant 0 : i32
    return %c0_i32, %arg0 : i32, i32
  }
  func.func @transform_1(%arg0: i32) -> (i32, i32) {
    %c0_i32 = arith.constant 0 : i32
    %c0_i32_0 = arith.constant 0 : i32
    return %c0_i32, %arg0 : i32, i32
  }
  func.func @transform_2(%arg0: i32) -> (i32, i32) {
    %c0_i32 = arith.constant 0 : i32
    %c0_i32_0 = arith.constant 0 : i32
    %c0_i32_1 = arith.constant 0 : i32
    return %c0_i32, %c0_i32_0 : i32, i32
  }
  func.func @transform_3(%arg0: i32) -> (i32, i32) {
    %c0_i32 = arith.constant 0 : i32
    %c0_i32_0 = arith.constant 0 : i32
    %c0_i32_1 = arith.constant 0 : i32
    return %c0_i32, %c0_i32_0 : i32, i32
  }
  func.func @transform_4(%arg0: i32) -> (i32, i32) {
    %c0_i32 = arith.constant 0 : i32
    %c0_i32_0 = arith.constant 0 : i32
    %c0_i32_1 = arith.constant 0 : i32
    return %c0_i32, %c0_i32_0 : i32, i32
  }
  func.func @transform_5(%arg0: i32) -> (i32, i32) {
    %c0_i32 = arith.constant 0 : i32
    %c0_i32_0 = arith.constant 0 : i32
    %c0_i32_1 = arith.constant 0 : i32
    return %c0_i32, %c0_i32_0 : i32, i32
  }
  func.func @transform_6(%arg0: i32) -> (i32, i32) {
    %c0_i32 = arith.constant 0 : i32
    %c0_i32_0 = arith.constant 0 : i32
    %c0_i32_1 = arith.constant 0 : i32
    return %c0_i32, %c0_i32_0 : i32, i32
  }
  func.func @transform_7(%arg0: i32) -> (i32, i32) {
    %c0_i32 = arith.constant 0 : i32
    %c0_i32_0 = arith.constant 0 : i32
    %c0_i32_1 = arith.constant 0 : i32
    return %c0_i32, %c0_i32_0 : i32, i32
  }
  func.func @transform_8(%arg0: i32) -> (i32, i32) {
    %c0_i32 = arith.constant 0 : i32
    %c0_i32_0 = arith.constant 0 : i32
    %c0_i32_1 = arith.constant 0 : i32
    return %c0_i32, %c0_i32_0 : i32, i32
  }
  func.func @transform_9(%arg0: i32) -> (i32, i32) {
    %c0_i32 = arith.constant 0 : i32
    %c0_i32_0 = arith.constant 0 : i32
    %c0_i32_1 = arith.constant 0 : i32
    return %c0_i32, %c0_i32_0 : i32, i32
  }
  func.func @transform_10(%arg0: i32) -> (i32, i32) {
    %c0_i32 = arith.constant 0 : i32
    %c0_i32_0 = arith.constant 0 : i32
    %c0_i32_1 = arith.constant 0 : i32
    return %c0_i32, %c0_i32_0 : i32, i32
  }
  func.func @transform_11(%arg0: i32) -> (i32, i32) {
    %c0_i32 = arith.constant 0 : i32
    %c0_i32_0 = arith.constant 0 : i32
    return %c0_i32, %arg0 : i32, i32
  }
}

</mosaic_0001>

<llo_original>
// kernel: _lambda_.1
$region0: #{_lambda_.1}
  #allocation0 [shape = 'u32[]', space=smem, size = 0x4, offset = 0x4, fixed_abs, tag = 'smem constant byte address 0x4 - core index']
  #allocation1 [shape = 'u32[144,128]{1,0:T(1,128)}', space=vmem, size = 0x12000, scoped, tag = 'internal scratch']
  #allocation2 [shape = 'f32[1,1]{1,0:T(1,128)S(1)}', space=vmem, size = 0x200, scoped, tag = 'scoped memory for _lambda_.1']
  %s0 = inlined_call_operand.vmem [shape: f32[12,128], index: 0, kind: input, shape index: {}]
  %s1 = inlined_call_operand.vmem [shape: f32[4,128], index: 1, kind: input, shape index: {}]
  %s2 = inlined_call_operand.vmem [shape: f32[32,12], index: 2, kind: input, shape index: {}]
  %s3 = inlined_call_operand.vmem [shape: f32[32,1], index: 3, kind: input, shape index: {}]
  %s4 = inlined_call_operand.hbm [shape: f32[32,4], index: 4, kind: input, shape index: {}]
  %s5 = inlined_call_operand.hbm [shape: f32[32,1], index: 5, kind: input, shape index: {}]
  %s6 = inlined_call_operand.hbm [shape: f32[32,32], index: 6, kind: input, shape index: {}]
  %s7 = inlined_call_operand.hbm [shape: f32[32,32], index: 7, kind: input, shape index: {}]
  %s8 = inlined_call_operand.hbm [shape: f32[32,1], index: 8, kind: input, shape index: {}]
  %s9 = inlined_call_operand.vmem [shape: f32[1,32], index: 9, kind: input, shape index: {}]
  %s10 = inlined_call_operand.<no memory space> [shape: f32[1,1], index: 10, kind: input, shape index: {}]
  %s11 = inlined_call_operand.vmem [shape: f32[1,128], index: 11, kind: output, shape index: {}]
  %s12 = sld [smem:[#allocation0]]
  $region74: #{_lambda_.1} parent=0
    _
  %s14 = ssub.s32 1, %s12
  %s15 = scalar_select 0, %s14, %s12
  %v16 = vstv %s10
  %17 = vst [vmem:[#allocation2] sm:$0x1] %v16
  $region1: #{_lambda_.1} parent=0
    #allocation3 [shape = 'u8[16384]{0}', space=vmem, size = 0x4000, scoped, tag = 'input window, operand 4, single buffered']
    #allocation4 [shape = 's32[1]{0}', space=sflag, size = 0x4, scoped, tag = 'scoped memory for _lambda_.1']
    #allocation5 [shape = 'u8[16384]{0}', space=vmem, size = 0x4000, scoped, tag = 'input window, operand 5, single buffered']
    #allocation6 [shape = 's32[1]{0}', space=sflag, size = 0x4, scoped, tag = 'scoped memory for _lambda_.1']
    #allocation7 [shape = 'u8[16384]{0}', space=vmem, size = 0x4000, scoped, tag = 'input window, operand 6, single buffered']
    #allocation8 [shape = 'u8[16384]{0}', space=vmem, size = 0x4000, scoped, tag = 'input window, operand 7, single buffered']
    #allocation9 [shape = 's32[1]{0}', space=sflag, size = 0x4, scoped, tag = 'scoped memory for _lambda_.1']
    #allocation10 [shape = 'u8[16384]{0}', space=vmem, size = 0x4000, scoped, tag = 'input window, operand 8, single buffered']
    %18 = vsyncpa [#allocation4], 0
    %19 = vsyncpa [#allocation6], 0
    %20 = vsyncpa [#allocation9], 0
    // Predicated region
    $region2: #{_lambda_.1} parent=1 // pred_check
      _
    $region3: #{_lambda_.1} parent=1 // pred_check_branch
      %22 = sbr.rel (0) target = $region5
    $region4: #{_lambda_.1} parent=1 // pred_region
      _
    $region5: #{_lambda_.1} parent=1 // pred_fallthru
      _
    // Predicated region
    $region6: #{_lambda_.1} parent=1 // pred_check
      _
    $region7: #{_lambda_.1} parent=1 // pred_check_branch
      %24 = sbr.rel (0) target = $region9
    $region8: #{_lambda_.1} parent=1 // pred_region
      _
    $region9: #{_lambda_.1} parent=1 // pred_fallthru
      _
    // Predicated region
    $region10: #{_lambda_.1} parent=1 // pred_check
      _
    $region11: #{_lambda_.1} parent=1 // pred_check_branch
      %26 = sbr.rel (0) target = $region13
    $region12: #{_lambda_.1} parent=1 // pred_region
      _
    $region13: #{_lambda_.1} parent=1 // pred_fallthru
      _
    // Predicated region
    $region14: #{_lambda_.1} parent=1 // pred_check
      _
    $region15: #{_lambda_.1} parent=1 // pred_check_branch
      %28 = sbr.rel (0) target = $region17
    $region16: #{_lambda_.1} parent=1 // pred_region
      _
    $region17: #{_lambda_.1} parent=1 // pred_fallthru
      _
    // Predicated region
    $region18: #{_lambda_.1} parent=1 // pred_check
      _
    $region19: #{_lambda_.1} parent=1 // pred_check_branch
      %30 = sbr.rel (0) target = $region21
    $region20: #{_lambda_.1} parent=1 // pred_region
      %s32 = ssub.s32 512, 512
      %33 = vsyncadd [#allocation4], %s32
      %s34 = sshll.u32 [#allocation3], 4
      %s35 = int_to_ptr.vmem [resolvable:$true] %s34
      %40 = dma.hbm_to_vmem [thread:$0]  %s4, 512, %s35, [#allocation4], 128, 128, 8
    $region21: #{_lambda_.1} parent=1 // pred_fallthru
      _
    // Predicated region
    $region22: #{_lambda_.1} parent=1 // pred_check
      _
    $region23: #{_lambda_.1} parent=1 // pred_check_branch
      %42 = sbr.rel (0) target = $region25
    $region24: #{_lambda_.1} parent=1 // pred_region
      %s44 = ssub.s32 512, 512
      %45 = vsyncadd [#allocation6], %s44
      %s46 = sshll.u32 [#allocation5], 4
      %s47 = int_to_ptr.vmem [resolvable:$true] %s46
      %52 = dma.hbm_to_vmem [thread:$0]  %s5, 512, %s47, [#allocation6], 128, 128, 8
    $region25: #{_lambda_.1} parent=1 // pred_fallthru
      _
    // Predicated region
    $region26: #{_lambda_.1} parent=1 // pred_check
      _
    $region27: #{_lambda_.1} parent=1 // pred_check_branch
      %54 = sbr.rel (0) target = $region29
    $region28: #{_lambda_.1} parent=1 // pred_region
      %s56 = ssub.s32 512, 512
      %57 = vsyncadd [#allocation6], %s56
      %s58 = sshll.u32 [#allocation7], 4
      %s59 = int_to_ptr.vmem [resolvable:$true] %s58
      %64 = dma.hbm_to_vmem [thread:$0]  %s6, 512, %s59, [#allocation6], 128, 128, 8
    $region29: #{_lambda_.1} parent=1 // pred_fallthru
      _
    // Predicated region
    $region30: #{_lambda_.1} parent=1 // pred_check
      _
    $region31: #{_lambda_.1} parent=1 // pred_check_branch
      %66 = sbr.rel (0) target = $region33
    $region32: #{_lambda_.1} parent=1 // pred_region
      %s68 = ssub.s32 512, 512
      %69 = vsyncadd [#allocation9], %s68
      %s70 = sshll.u32 [#allocation8], 4
      %s71 = int_to_ptr.vmem [resolvable:$true] %s70
      %76 = dma.hbm_to_vmem [thread:$0]  %s7, 512, %s71, [#allocation9], 128, 128, 8
    $region33: #{_lambda_.1} parent=1 // pred_fallthru
      _
    // Predicated region
    $region34: #{_lambda_.1} parent=1 // pred_check
      _
    $region35: #{_lambda_.1} parent=1 // pred_check_branch
      %78 = sbr.rel (0) target = $region37
    $region36: #{_lambda_.1} parent=1 // pred_region
      %s80 = ssub.s32 512, 512
      %81 = vsyncadd [#allocation9], %s80
      %s82 = sshll.u32 [#allocation10], 4
      %s83 = int_to_ptr.vmem [resolvable:$true] %s82
      %88 = dma.hbm_to_vmem [thread:$0]  %s8, 512, %s83, [#allocation9], 128, 128, 8
    $region37: #{_lambda_.1} parent=1 // pred_fallthru
      _
    // Predicated region
    $region38: #{_lambda_.1} parent=1 // pred_check
      _
    $region39: #{_lambda_.1} parent=1 // pred_check_branch
      %90 = sbr.rel (0) target = $region41
    $region40: #{_lambda_.1} parent=1 // pred_region
      _
    $region41: #{_lambda_.1} parent=1 // pred_fallthru
      _
    // Predicated region
    $region42: #{_lambda_.1} parent=1 // pred_check
      _
    $region43: #{_lambda_.1} parent=1 // pred_check_branch
      %92 = sbr.rel (0) target = $region45
    $region44: #{_lambda_.1} parent=1 // pred_region
      _
    $region45: #{_lambda_.1} parent=1 // pred_fallthru
      _
    // Predicated region
    $region46: #{_lambda_.1} parent=1 // pred_check
      _
    $region47: #{_lambda_.1} parent=1 // pred_check_branch
      %94 = sbr.rel (0) target = $region49
    $region48: #{_lambda_.1} parent=1 // pred_region
      %95 = dma.done [#allocation4], 512
    $region49: #{_lambda_.1} parent=1 // pred_fallthru
      _
    // Predicated region
    $region50: #{_lambda_.1} parent=1 // pred_check
      _
    $region51: #{_lambda_.1} parent=1 // pred_check_branch
      %97 = sbr.rel (0) target = $region53
    $region52: #{_lambda_.1} parent=1 // pred_region
      %98 = dma.done [#allocation6], 512
    $region53: #{_lambda_.1} parent=1 // pred_fallthru
      _
    // Predicated region
    $region54: #{_lambda_.1} parent=1 // pred_check
      _
    $region55: #{_lambda_.1} parent=1 // pred_check_branch
      %100 = sbr.rel (0) target = $region57
    $region56: #{_lambda_.1} parent=1 // pred_region
      %101 = dma.done [#allocation6], 512
    $region57: #{_lambda_.1} parent=1 // pred_fallthru
      _
    // Predicated region
    $region58: #{_lambda_.1} parent=1 // pred_check
      _
    $region59: #{_lambda_.1} parent=1 // pred_check_branch
      %103 = sbr.rel (0) target = $region61
    $region60: #{_lambda_.1} parent=1 // pred_region
      %104 = dma.done [#allocation9], 512
    $region61: #{_lambda_.1} parent=1 // pred_fallthru
      _
    // Predicated region
    $region62: #{_lambda_.1} parent=1 // pred_check
      _
    $region63: #{_lambda_.1} parent=1 // pred_check_branch
      %106 = sbr.rel (0) target = $region65
    $region64: #{_lambda_.1} parent=1 // pred_region
      %107 = dma.done [#allocation9], 512
    $region65: #{_lambda_.1} parent=1 // pred_fallthru
      _
    %v108 = vld [vmem:[%s2] sm:$0xff]
    %v109 = vld [vmem:[%s2 + $0x8] sm:$0xff]
    %v110 = vld [vmem:[%s2 + $0x10] sm:$0xff]
    %v111 = vld [vmem:[%s2 + $0x18] sm:$0xff]
    %v112 = vld [vmem:[%s0] sm:$0xff]
    %v113 = vld [vmem:[%s0 + $0x8] sm:$0xf]
    %v114 = vld [vmem:[%s3] sm:$0xff]
    %v115 = vld [vmem:[%s3 + $0x8] sm:$0xff]
    %v116 = vld [vmem:[%s3 + $0x10] sm:$0xff]
    %v117 = vld [vmem:[%s3 + $0x18] sm:$0xff]
    %119 = vset.pattern.permute.xlu0 0
    %120 = vperm.xlu0 %119, %v114
    %v121 = vpop.permute.xlu0 %120
    %124 = vset.pattern.permute.xlu0 0
    %125 = vperm.xlu0 %124, %v115
    %v126 = vpop.permute.xlu0 %125
    %129 = vset.pattern.permute.xlu0 0
    %130 = vperm.xlu0 %129, %v116
    %v131 = vpop.permute.xlu0 %130
    %134 = vset.pattern.permute.xlu0 0
    %135 = vperm.xlu0 %134, %v117
    %v136 = vpop.permute.xlu0 %135
    %vm138 = vcmask 97280
    %v140 = vsel %vm138, %v108, 0
    %v143 = vsel %vm138, %v109, 0
    %v146 = vsel %vm138, %v110, 0
    %v149 = vsel %vm138, %v111, 0
    %vm151 = vcmask 1043456
    %v153 = vsel %vm151, %v113, 0
    %155 = vmatprep.subr.mxu0 0.0
    %156 = vmatpush1.msra.mxu0 0.0
    %157 = vmatprep.subr.mxu0 0.0
    %158 = vmatpush1.msra.mxu0 0.0
    %159 = vmatprep.subr.mxu0 0.0
    %160 = vmatpush1.msra.mxu0 0.0
    %161 = vmatprep.subr.mxu0 0.0
    %162 = vmatpush1.msra.mxu0 0.0
    %163 = vmatprep.subr.mxu0 0.0
    %164 = vmatpush1.msra.mxu0 0.0
    %165 = vmatprep.subr.mxu0 0.0
    %166 = vmatpush1.msra.mxu0 0.0
    %167 = vmatprep.subr.mxu0 0.0
    %168 = vmatpush1.msra.mxu0 0.0
    %169 = vmatprep.subr.mxu0 0.0
    %170 = vmatpush1.msra.mxu0 0.0
    %171 = vmatprep.subr.mxu0 0.0
    %172 = vmatpush1.msra.mxu0 0.0
    %173 = vmatprep.subr.mxu0 0.0
    %174 = vmatpush1.msra.mxu0 0.0
    %175 = vmatprep.subr.mxu0 0.0
    %176 = vmatpush1.msra.mxu0 0.0
    %177 = vmatprep.subr.mxu0 0.0
    %178 = vmatpush1.msra.mxu0 0.0
    %179 = vmatprep.subr.mxu0 0.0
    %180 = vmatpush1.msra.mxu0 0.0
    %181 = vmatprep.subr.mxu0 0.0
    %182 = vmatpush1.msra.mxu0 0.0
    %183 = vmatprep.subr.mxu0 0.0
    %184 = vmatpush1.msra.mxu0 %v153
    %185 = vmatprep.subr.mxu0 0.0
    %186 = vmatpush1.msra.mxu0 %v112
    %187 = vmatprep.subr.mxu0 0.0
    %188 = vmatpush2.msra.mxu0 0.0
    %189 = vmatprep.subr.mxu0 0.0
    %190 = vmatpush2.msra.mxu0 0.0
    %191 = vmatprep.subr.mxu0 0.0
    %192 = vmatpush2.msra.mxu0 0.0
    %193 = vmatprep.subr.mxu0 0.0
    %194 = vmatpush2.msra.mxu0 0.0
    %195 = vmatprep.subr.mxu0 0.0
    %196 = vmatpush2.msra.mxu0 0.0
    %197 = vmatprep.subr.mxu0 0.0
    %198 = vmatpush2.msra.mxu0 0.0
    %199 = vmatprep.subr.mxu0 0.0
    %200 = vmatpush2.msra.mxu0 0.0
    %201 = vmatprep.subr.mxu0 0.0
    %202 = vmatpush2.msra.mxu0 0.0
    %203 = vmatprep.subr.mxu0 0.0
    %204 = vmatpush2.msra.mxu0 0.0
    %205 = vmatprep.subr.mxu0 0.0
    %206 = vmatpush2.msra.mxu0 0.0
    %207 = vmatprep.subr.mxu0 0.0
    %208 = vmatpush2.msra.mxu0 0.0
    %209 = vmatprep.subr.mxu0 0.0
    %210 = vmatpush2.msra.mxu0 0.0
    %211 = vmatprep.subr.mxu0 0.0
    %212 = vmatpush2.msra.mxu0 0.0
    %213 = vmatprep.subr.mxu0 0.0
    %214 = vmatpush2.msra.mxu0 0.0
    %215 = vmatprep.subr.mxu0 0.0
    %216 = vmatpush2.msra.mxu0 0.0
    %217 = vmatprep.subr.mxu0 0.0
    %218 = vmatpush2.msra.mxu0 0.0
    %219 = vmatprep.mubr.f32.mxu0 0.0
    %220 = vmatmul.mubr.f32.gmra.mxu0 %v140
    %v221 = vpop.f32.mrf.mxu0
    %v222 = vadd.f32 %v121, %v221
    %v223 = vpop.f32.mrf.mxu0
    %224 = vmatprep.mubr.f32.mxu0 0.0
    %225 = vmatmul.mubr.f32.gmra.mxu0 %v143
    %v226 = vpop.f32.mrf.mxu0
    %v227 = vadd.f32 %v126, %v226
    %v228 = vpop.f32.mrf.mxu0
    %229 = vmatprep.mubr.f32.mxu0 0.0
    %230 = vmatmul.mubr.f32.gmra.mxu0 %v146
    %v231 = vpop.f32.mrf.mxu0
    %v232 = vadd.f32 %v131, %v231
    %v233 = vpop.f32.mrf.mxu0
    %234 = vmatprep.mubr.f32.mxu0 0.0
    %235 = vmatmul.mubr.f32.gmra.mxu0 %v149
    %v236 = vpop.f32.mrf.mxu0
    %v237 = vadd.f32 %v136, %v236
    %v238 = vpop.f32.mrf.mxu0
    %239 = vdwg.mxu0
    %v240 = vmax.f32 %v222, 0.0
    %v241 = vmax.f32 %v227, 0.0
    %v242 = vmax.f32 %v232, 0.0
    %v243 = vmax.f32 %v237, 0.0
    %v244 = vld [vmem:[#allocation3] sm:$0xff]
    %v245 = vld [vmem:[#allocation3 + $0x8] sm:$0xff]
    %v246 = vld [vmem:[#allocation3 + $0x10] sm:$0xff]
    %v247 = vld [vmem:[#allocation3 + $0x18] sm:$0xff]
    %v248 = vld [vmem:[%s1] sm:$0xf]
    %v249 = vld [vmem:[#allocation5] sm:$0xff]
    %v250 = vld [vmem:[#allocation5 + $0x8] sm:$0xff]
    %v251 = vld [vmem:[#allocation5 + $0x10] sm:$0xff]
    %v252 = vld [vmem:[#allocation5 + $0x18] sm:$0xff]
    %254 = vset.pattern.permute.xlu0 0
    %255 = vperm.xlu0 %254, %v249
    %v256 = vpop.permute.xlu0 %255
    %259 = vset.pattern.permute.xlu0 0
    %260 = vperm.xlu0 %259, %v250
    %v261 = vpop.permute.xlu0 %260
    %264 = vset.pattern.permute.xlu0 0
    %265 = vperm.xlu0 %264, %v251
    %v266 = vpop.permute.xlu0 %265
    %269 = vset.pattern.permute.xlu0 0
    %270 = vperm.xlu0 %269, %v252
    %v271 = vpop.permute.xlu0 %270
    %vm273 = vcmask 31744
    %v275 = vsel %vm273, %v244, 0
    %v278 = vsel %vm273, %v245, 0
    %v281 = vsel %vm273, %v246, 0
    %v284 = vsel %vm273, %v247, 0
    %v287 = vsel %vm151, %v248, 0
    %289 = vmatprep.subr.mxu0 0.0
    %290 = vmatpush1.msra.mxu0 0.0
    %291 = vmatprep.subr.mxu0 0.0
    %292 = vmatpush1.msra.mxu0 0.0
    %293 = vmatprep.subr.mxu0 0.0
    %294 = vmatpush1.msra.mxu0 0.0
    %295 = vmatprep.subr.mxu0 0.0
    %296 = vmatpush1.msra.mxu0 0.0
    %297 = vmatprep.subr.mxu0 0.0
    %298 = vmatpush1.msra.mxu0 0.0
    %299 = vmatprep.subr.mxu0 0.0
    %300 = vmatpush1.msra.mxu0 0.0
    %301 = vmatprep.subr.mxu0 0.0
    %302 = vmatpush1.msra.mxu0 0.0
    %303 = vmatprep.subr.mxu0 0.0
    %304 = vmatpush1.msra.mxu0 0.0
    %305 = vmatprep.subr.mxu0 0.0
    %306 = vmatpush1.msra.mxu0 0.0
    %307 = vmatprep.subr.mxu0 0.0
    %308 = vmatpush1.msra.mxu0 0.0
    %309 = vmatprep.subr.mxu0 0.0
    %310 = vmatpush1.msra.mxu0 0.0
    %311 = vmatprep.subr.mxu0 0.0
    %312 = vmatpush1.msra.mxu0 0.0
    %313 = vmatprep.subr.mxu0 0.0
    %314 = vmatpush1.msra.mxu0 0.0
    %315 = vmatprep.subr.mxu0 0.0
    %316 = vmatpush1.msra.mxu0 0.0
    %317 = vmatprep.subr.mxu0 0.0
    %318 = vmatpush1.msra.mxu0 0.0
    %319 = vmatprep.subr.mxu0 0.0
    %320 = vmatpush1.msra.mxu0 %v287
    %321 = vmatprep.subr.mxu0 0.0
    %322 = vmatpush2.msra.mxu0 0.0
    %323 = vmatprep.subr.mxu0 0.0
    %324 = vmatpush2.msra.mxu0 0.0
    %325 = vmatprep.subr.mxu0 0.0
    %326 = vmatpush2.msra.mxu0 0.0
    %327 = vmatprep.subr.mxu0 0.0
    %328 = vmatpush2.msra.mxu0 0.0
    %329 = vmatprep.subr.mxu0 0.0
    %330 = vmatpush2.msra.mxu0 0.0
    %331 = vmatprep.subr.mxu0 0.0
    %332 = vmatpush2.msra.mxu0 0.0
    %333 = vmatprep.subr.mxu0 0.0
    %334 = vmatpush2.msra.mxu0 0.0
    %335 = vmatprep.subr.mxu0 0.0
    %336 = vmatpush2.msra.mxu0 0.0
    %337 = vmatprep.subr.mxu0 0.0
    %338 = vmatpush2.msra.mxu0 0.0
    %339 = vmatprep.subr.mxu0 0.0
    %340 = vmatpush2.msra.mxu0 0.0
    %341 = vmatprep.subr.mxu0 0.0
    %342 = vmatpush2.msra.mxu0 0.0
    %343 = vmatprep.subr.mxu0 0.0
    %344 = vmatpush2.msra.mxu0 0.0
    %345 = vmatprep.subr.mxu0 0.0
    %346 = vmatpush2.msra.mxu0 0.0
    %347 = vmatprep.subr.mxu0 0.0
    %348 = vmatpush2.msra.mxu0 0.0
    %349 = vmatprep.subr.mxu0 0.0
    %350 = vmatpush2.msra.mxu0 0.0
    %351 = vmatprep.subr.mxu0 0.0
    %352 = vmatpush2.msra.mxu0 0.0
    %353 = vmatprep.mubr.f32.mxu0 0.0
    %354 = vmatmul.mubr.f32.gmra.mxu0 %v275
    %v355 = vpop.f32.mrf.mxu0
    %v356 = vadd.f32 %v256, %v355
    %v357 = vpop.f32.mrf.mxu0
    %358 = vmatprep.mubr.f32.mxu0 0.0
    %359 = vmatmul.mubr.f32.gmra.mxu0 %v278
    %v360 = vpop.f32.mrf.mxu0
    %v361 = vadd.f32 %v261, %v360
    %v362 = vpop.f32.mrf.mxu0
    %363 = vmatprep.mubr.f32.mxu0 0.0
    %364 = vmatmul.mubr.f32.gmra.mxu0 %v281
    %v365 = vpop.f32.mrf.mxu0
    %v366 = vadd.f32 %v266, %v365
    %v367 = vpop.f32.mrf.mxu0
    %368 = vmatprep.mubr.f32.mxu0 0.0
    %369 = vmatmul.mubr.f32.gmra.mxu0 %v284
    %v370 = vpop.f32.mrf.mxu0
    %v371 = vadd.f32 %v271, %v370
    %v372 = vpop.f32.mrf.mxu0
    %373 = vdwg.mxu0
    %v374 = vmax.f32 %v356, 0.0
    %v375 = vmax.f32 %v361, 0.0
    %v376 = vmax.f32 %v366, 0.0
    %v377 = vmax.f32 %v371, 0.0
    %v378 = vld [vmem:[#allocation7] sm:$0xff]
    %v379 = vld [vmem:[#allocation7 + $0x8] sm:$0xff]
    %v380 = vld [vmem:[#allocation7 + $0x10] sm:$0xff]
    %v381 = vld [vmem:[#allocation7 + $0x18] sm:$0xff]
    %v382 = vld [vmem:[#allocation8] sm:$0xff]
    %v383 = vld [vmem:[#allocation8 + $0x8] sm:$0xff]
    %v384 = vld [vmem:[#allocation8 + $0x10] sm:$0xff]
    %v385 = vld [vmem:[#allocation8 + $0x18] sm:$0xff]
    %vm386 = vcmask 261120
    %v388 = vsel %vm386, %v382, 0
    %v391 = vsel %vm386, %v383, 0
    %v394 = vsel %vm386, %v384, 0
    %v397 = vsel %vm386, %v385, 0
    %399 = vmatprep.subr.mxu0 0.0
    %400 = vmatpush1.msra.mxu0 0.0
    %401 = vmatprep.subr.mxu0 0.0
    %402 = vmatpush1.msra.mxu0 0.0
    %403 = vmatprep.subr.mxu0 0.0
    %404 = vmatpush1.msra.mxu0 0.0
    %405 = vmatprep.subr.mxu0 0.0
    %406 = vmatpush1.msra.mxu0 0.0
    %407 = vmatprep.subr.mxu0 0.0
    %408 = vmatpush1.msra.mxu0 0.0
    %409 = vmatprep.subr.mxu0 0.0
    %410 = vmatpush1.msra.mxu0 0.0
    %411 = vmatprep.subr.mxu0 0.0
    %412 = vmatpush1.msra.mxu0 0.0
    %413 = vmatprep.subr.mxu0 0.0
    %414 = vmatpush1.msra.mxu0 0.0
    %415 = vmatprep.subr.mxu0 0.0
    %416 = vmatpush1.msra.mxu0 0.0
    %417 = vmatprep.subr.mxu0 0.0
    %418 = vmatpush1.msra.mxu0 0.0
    %419 = vmatprep.subr.mxu0 0.0
    %420 = vmatpush1.msra.mxu0 0.0
    %421 = vmatprep.subr.mxu0 0.0
    %422 = vmatpush1.msra.mxu0 0.0
    %423 = vmatprep.subr.mxu0 0.0
    %424 = vmatpush1.msra.mxu0 %v377
    %425 = vmatprep.subr.mxu0 0.0
    %426 = vmatpush1.msra.mxu0 %v376
    %427 = vmatprep.subr.mxu0 0.0
    %428 = vmatpush1.msra.mxu0 %v375
    %429 = vmatprep.subr.mxu0 0.0
    %430 = vmatpush1.msra.mxu0 %v374
    %431 = vmatprep.subr.mxu0 0.0
    %432 = vmatpush2.msra.mxu0 0.0
    %433 = vmatprep.subr.mxu0 0.0
    %434 = vmatpush2.msra.mxu0 0.0
    %435 = vmatprep.subr.mxu0 0.0
    %436 = vmatpush2.msra.mxu0 0.0
    %437 = vmatprep.subr.mxu0 0.0
    %438 = vmatpush2.msra.mxu0 0.0
    %439 = vmatprep.subr.mxu0 0.0
    %440 = vmatpush2.msra.mxu0 0.0
    %441 = vmatprep.subr.mxu0 0.0
    %442 = vmatpush2.msra.mxu0 0.0
    %443 = vmatprep.subr.mxu0 0.0
    %444 = vmatpush2.msra.mxu0 0.0
    %445 = vmatprep.subr.mxu0 0.0
    %446 = vmatpush2.msra.mxu0 0.0
    %447 = vmatprep.subr.mxu0 0.0
    %448 = vmatpush2.msra.mxu0 0.0
    %449 = vmatprep.subr.mxu0 0.0
    %450 = vmatpush2.msra.mxu0 0.0
    %451 = vmatprep.subr.mxu0 0.0
    %452 = vmatpush2.msra.mxu0 0.0
    %453 = vmatprep.subr.mxu0 0.0
    %454 = vmatpush2.msra.mxu0 0.0
    %455 = vmatprep.subr.mxu0 0.0
    %456 = vmatpush2.msra.mxu0 0.0
    %457 = vmatprep.subr.mxu0 0.0
    %458 = vmatpush2.msra.mxu0 0.0
    %459 = vmatprep.subr.mxu0 0.0
    %460 = vmatpush2.msra.mxu0 0.0
    %461 = vmatprep.subr.mxu0 0.0
    %462 = vmatpush2.msra.mxu0 0.0
    %463 = vmatprep.mubr.f32.mxu0 0.0
    %464 = vmatmul.mubr.f32.gmra.mxu0 %v388
    %v465 = vpop.f32.mrf.mxu0
    %v466 = vadd.f32 0.0, %v465
    %v467 = vpop.f32.mrf.mxu0
    %468 = vmatprep.mubr.f32.mxu0 0.0
    %469 = vmatmul.mubr.f32.gmra.mxu0 %v391
    %v470 = vpop.f32.mrf.mxu0
    %v471 = vadd.f32 0.0, %v470
    %v472 = vpop.f32.mrf.mxu0
    %473 = vmatprep.mubr.f32.mxu0 0.0
    %474 = vmatmul.mubr.f32.gmra.mxu0 %v394
    %v475 = vpop.f32.mrf.mxu0
    %v476 = vadd.f32 0.0, %v475
    %v477 = vpop.f32.mrf.mxu0
    %478 = vmatprep.mubr.f32.mxu0 0.0
    %479 = vmatmul.mubr.f32.gmra.mxu0 %v397
    %v480 = vpop.f32.mrf.mxu0
    %v481 = vadd.f32 0.0, %v480
    %v482 = vpop.f32.mrf.mxu0
    %483 = vdwg.mxu0
    %v485 = vsel %vm386, %v378, 0
    %v488 = vsel %vm386, %v379, 0
    %v491 = vsel %vm386, %v380, 0
    %v494 = vsel %vm386, %v381, 0
    %496 = vmatprep.subr.mxu0 0.0
    %497 = vmatpush1.msra.mxu0 0.0
    %498 = vmatprep.subr.mxu0 0.0
    %499 = vmatpush1.msra.mxu0 0.0
    %500 = vmatprep.subr.mxu0 0.0
    %501 = vmatpush1.msra.mxu0 0.0
    %502 = vmatprep.subr.mxu0 0.0
    %503 = vmatpush1.msra.mxu0 0.0
    %504 = vmatprep.subr.mxu0 0.0
    %505 = vmatpush1.msra.mxu0 0.0
    %506 = vmatprep.subr.mxu0 0.0
    %507 = vmatpush1.msra.mxu0 0.0
    %508 = vmatprep.subr.mxu0 0.0
    %509 = vmatpush1.msra.mxu0 0.0
    %510 = vmatprep.subr.mxu0 0.0
    %511 = vmatpush1.msra.mxu0 0.0
    %512 = vmatprep.subr.mxu0 0.0
    %513 = vmatpush1.msra.mxu0 0.0
    %514 = vmatprep.subr.mxu0 0.0
    %515 = vmatpush1.msra.mxu0 0.0
    %516 = vmatprep.subr.mxu0 0.0
    %517 = vmatpush1.msra.mxu0 0.0
    %518 = vmatprep.subr.mxu0 0.0
    %519 = vmatpush1.msra.mxu0 0.0
    %520 = vmatprep.subr.mxu0 0.0
    %521 = vmatpush1.msra.mxu0 %v243
    %522 = vmatprep.subr.mxu0 0.0
    %523 = vmatpush1.msra.mxu0 %v242
    %524 = vmatprep.subr.mxu0 0.0
    %525 = vmatpush1.msra.mxu0 %v241
    %526 = vmatprep.subr.mxu0 0.0
    %527 = vmatpush1.msra.mxu0 %v240
    %528 = vmatprep.subr.mxu0 0.0
    %529 = vmatpush2.msra.mxu0 0.0
    %530 = vmatprep.subr.mxu0 0.0
    %531 = vmatpush2.msra.mxu0 0.0
    %532 = vmatprep.subr.mxu0 0.0
    %533 = vmatpush2.msra.mxu0 0.0
    %534 = vmatprep.subr.mxu0 0.0
    %535 = vmatpush2.msra.mxu0 0.0
    %536 = vmatprep.subr.mxu0 0.0
    %537 = vmatpush2.msra.mxu0 0.0
    %538 = vmatprep.subr.mxu0 0.0
    %539 = vmatpush2.msra.mxu0 0.0
    %540 = vmatprep.subr.mxu0 0.0
    %541 = vmatpush2.msra.mxu0 0.0
    %542 = vmatprep.subr.mxu0 0.0
    %543 = vmatpush2.msra.mxu0 0.0
    %544 = vmatprep.subr.mxu0 0.0
    %545 = vmatpush2.msra.mxu0 0.0
    %546 = vmatprep.subr.mxu0 0.0
    %547 = vmatpush2.msra.mxu0 0.0
    %548 = vmatprep.subr.mxu0 0.0
    %549 = vmatpush2.msra.mxu0 0.0
    %550 = vmatprep.subr.mxu0 0.0
    %551 = vmatpush2.msra.mxu0 0.0
    %552 = vmatprep.subr.mxu0 0.0
    %553 = vmatpush2.msra.mxu0 0.0
    %554 = vmatprep.subr.mxu0 0.0
    %555 = vmatpush2.msra.mxu0 0.0
    %556 = vmatprep.subr.mxu0 0.0
    %557 = vmatpush2.msra.mxu0 0.0
    %558 = vmatprep.subr.mxu0 0.0
    %559 = vmatpush2.msra.mxu0 0.0
    %560 = vmatprep.mubr.f32.mxu0 0.0
    %561 = vmatmul.mubr.f32.gmra.mxu0 %v485
    %v562 = vpop.f32.mrf.mxu0
    %v563 = vadd.f32 %v466, %v562
    %v564 = vpop.f32.mrf.mxu0
    %565 = vmatprep.mubr.f32.mxu0 0.0
    %566 = vmatmul.mubr.f32.gmra.mxu0 %v488
    %v567 = vpop.f32.mrf.mxu0
    %v568 = vadd.f32 %v471, %v567
    %v569 = vpop.f32.mrf.mxu0
    %570 = vmatprep.mubr.f32.mxu0 0.0
    %571 = vmatmul.mubr.f32.gmra.mxu0 %v491
    %v572 = vpop.f32.mrf.mxu0
    %v573 = vadd.f32 %v476, %v572
    %v574 = vpop.f32.mrf.mxu0
    %575 = vmatprep.mubr.f32.mxu0 0.0
    %576 = vmatmul.mubr.f32.gmra.mxu0 %v494
    %v577 = vpop.f32.mrf.mxu0
    %v578 = vadd.f32 %v481, %v577
    %v579 = vpop.f32.mrf.mxu0
    %580 = vdwg.mxu0
    %v581 = vld [vmem:[#allocation10] sm:$0xff]
    %v582 = vld [vmem:[#allocation10 + $0x8] sm:$0xff]
    %v583 = vld [vmem:[#allocation10 + $0x10] sm:$0xff]
    %v584 = vld [vmem:[#allocation10 + $0x18] sm:$0xff]
    %586 = vset.pattern.permute.xlu0 0
    %587 = vperm.xlu0 %586, %v581
    %v588 = vpop.permute.xlu0 %587
    %591 = vset.pattern.permute.xlu0 0
    %592 = vperm.xlu0 %591, %v582
    %v593 = vpop.permute.xlu0 %592
    %596 = vset.pattern.permute.xlu0 0
    %597 = vperm.xlu0 %596, %v583
    %v598 = vpop.permute.xlu0 %597
    %601 = vset.pattern.permute.xlu0 0
    %602 = vperm.xlu0 %601, %v584
    %v603 = vpop.permute.xlu0 %602
    %v605 = vadd.f32 %v563, %v588
    %v606 = vadd.f32 %v568, %v593
    %v607 = vadd.f32 %v573, %v598
    %v608 = vadd.f32 %v578, %v603
    %v609 = vmax.f32 %v605, 0.0
    %v610 = vmax.f32 %v606, 0.0
    %v611 = vmax.f32 %v607, 0.0
    %v612 = vmax.f32 %v608, 0.0
    %v613 = vld [vmem:[%s9] sm:$0x1]
    %v614 = vld [vmem:[#allocation2] sm:$0x1]
    %616 = vset.pattern.permute.xlu0 0
    %617 = vperm.xlu0 %616, %v614
    %v618 = vpop.permute.xlu0 %617
    %v620 = vlaneseq
    %v621 = vshrl.u32 %v620, 7
    %v622 = vsub.s32 0, %v621
    %v623 = vrot.slane %v618, %v622
    %v625 = vsel %vm386, %v613, 0
    %627 = vmatprep.subr.mxu0 0.0
    %628 = vmatpush1.msra.mxu0 0.0
    %629 = vmatprep.subr.mxu0 0.0
    %630 = vmatpush1.msra.mxu0 0.0
    %631 = vmatprep.subr.mxu0 0.0
    %632 = vmatpush1.msra.mxu0 0.0
    %633 = vmatprep.subr.mxu0 0.0
    %634 = vmatpush1.msra.mxu0 0.0
    %635 = vmatprep.subr.mxu0 0.0
    %636 = vmatpush1.msra.mxu0 0.0
    %637 = vmatprep.subr.mxu0 0.0
    %638 = vmatpush1.msra.mxu0 0.0
    %639 = vmatprep.subr.mxu0 0.0
    %640 = vmatpush1.msra.mxu0 0.0
    %641 = vmatprep.subr.mxu0 0.0
    %642 = vmatpush1.msra.mxu0 0.0
    %643 = vmatprep.subr.mxu0 0.0
    %644 = vmatpush1.msra.mxu0 0.0
    %645 = vmatprep.subr.mxu0 0.0
    %646 = vmatpush1.msra.mxu0 0.0
    %647 = vmatprep.subr.mxu0 0.0
    %648 = vmatpush1.msra.mxu0 0.0
    %649 = vmatprep.subr.mxu0 0.0
    %650 = vmatpush1.msra.mxu0 0.0
    %651 = vmatprep.subr.mxu0 0.0
    %652 = vmatpush1.msra.mxu0 %v612
    %653 = vmatprep.subr.mxu0 0.0
    %654 = vmatpush1.msra.mxu0 %v611
    %655 = vmatprep.subr.mxu0 0.0
    %656 = vmatpush1.msra.mxu0 %v610
    %657 = vmatprep.subr.mxu0 0.0
    %658 = vmatpush1.msra.mxu0 %v609
    %659 = vmatprep.subr.mxu0 0.0
    %660 = vmatpush2.msra.mxu0 0.0
    %661 = vmatprep.subr.mxu0 0.0
    %662 = vmatpush2.msra.mxu0 0.0
    %663 = vmatprep.subr.mxu0 0.0
    %664 = vmatpush2.msra.mxu0 0.0
    %665 = vmatprep.subr.mxu0 0.0
    %666 = vmatpush2.msra.mxu0 0.0
    %667 = vmatprep.subr.mxu0 0.0
    %668 = vmatpush2.msra.mxu0 0.0
    %669 = vmatprep.subr.mxu0 0.0
    %670 = vmatpush2.msra.mxu0 0.0
    %671 = vmatprep.subr.mxu0 0.0
    %672 = vmatpush2.msra.mxu0 0.0
    %673 = vmatprep.subr.mxu0 0.0
    %674 = vmatpush2.msra.mxu0 0.0
    %675 = vmatprep.subr.mxu0 0.0
    %676 = vmatpush2.msra.mxu0 0.0
    %677 = vmatprep.subr.mxu0 0.0
    %678 = vmatpush2.msra.mxu0 0.0
    %679 = vmatprep.subr.mxu0 0.0
    %680 = vmatpush2.msra.mxu0 0.0
    %681 = vmatprep.subr.mxu0 0.0
    %682 = vmatpush2.msra.mxu0 0.0
    %683 = vmatprep.subr.mxu0 0.0
    %684 = vmatpush2.msra.mxu0 0.0
    %685 = vmatprep.subr.mxu0 0.0
    %686 = vmatpush2.msra.mxu0 0.0
    %687 = vmatprep.subr.mxu0 0.0
    %688 = vmatpush2.msra.mxu0 0.0
    %689 = vmatprep.subr.mxu0 0.0
    %690 = vmatpush2.msra.mxu0 0.0
    %691 = vmatprep.mubr.f32.mxu0 0.0
    %692 = vmatmul.mubr.f32.gmra.mxu0 %v625
    %v693 = vpop.f32.mrf.mxu0
    %v694 = vadd.f32 %v623, %v693
    %v695 = vpop.f32.mrf.mxu0
    %696 = vdwg.mxu0
    %v697 = vxor.u32 %v694, 2147483648
    %v698 = vmul.f32 %v697, 1.442695
    %v699 = vpow.pop %v698
    %v700 = vadd.f32 %v699, 1.0
    %v701 = vrcp.pop %v700
    %v702 = vmul.f32 1.0, %v701
    %703 = vst [vmem:[%s11] sm:$0x1] %v702
    // Predicated region
    $region66: #{_lambda_.1} parent=1 // pred_check
      _
    $region67: #{_lambda_.1} parent=1 // pred_check_branch
      %705 = sbr.rel (0) target = $region69
    $region68: #{_lambda_.1} parent=1 // pred_region
      _
    $region69: #{_lambda_.1} parent=1 // pred_fallthru
      _
    // Predicated region
    $region70: #{_lambda_.1} parent=1 // pred_check
      _
    $region71: #{_lambda_.1} parent=1 // pred_check_branch
      %707 = sbr.rel (0) target = $region73
    $region72: #{_lambda_.1} parent=1 // pred_region
      _
    $region73: #{_lambda_.1} parent=1 // pred_fallthru
      _
    %708 = vsyncpa [#allocation4], 1
    %709 = vsyncpa [#allocation6], 1
    %710 = vsyncpa [#allocation9], 1

</llo_original>
